<compile_context>
chip_gen: v7x
topology: tpu7x:2x2x1
jax: 0.10.0
libtpu: 0.0.40
codegen_flags: <defaults>
</compile_context>

<pallas_src>
import jax
import jax.numpy as jnp
from jax.experimental import pallas as pl
from jax.experimental.pallas import tpu as pltpu


def _round_up(x, m):
    return ((x + m - 1) // m) * m


def _pad2(a, rows_to, cols_to):
    r, c = a.shape
    if r == rows_to and c == cols_to:
        return a
    return jnp.pad(a, ((0, rows_to - r), (0, cols_to - c)))


def ffn_kernel(x_ref, w1_ref, b1_ref, w2_ref, b2_ref, o_ref, acc_ref):
    # x_ref:   (tm, Dp)  compute_dtype row tile (resident across the h axis)
    # w1_ref:  (Dp, tH)  streamed hidden block of W1
    # b1_ref:  (1, tH)   f32
    # w2_ref:  (tH, Dp)  streamed hidden block of W2
    # b2_ref:  (1, Dp)   f32
    # acc_ref: (tm, Dp)  f32 VMEM accumulator
    h_idx = pl.program_id(1)

    @pl.when(h_idx == 0)
    def _():
        acc_ref[...] = jnp.zeros_like(acc_ref)

    # First matmul on the MXU, f32 accumulation; bias + ReLU on the VPU in f32.
    h = jnp.dot(x_ref[...], w1_ref[...], preferred_element_type=jnp.float32)
    h = jnp.maximum(h + b1_ref[...], 0.0)

    # Second matmul for this hidden block, accumulated into f32 scratch.
    acc_ref[...] += jnp.dot(
        h.astype(w2_ref.dtype), w2_ref[...], preferred_element_type=jnp.float32
    )

    @pl.when(h_idx == pl.num_programs(1) - 1)
    def _():
        o_ref[...] = (acc_ref[...] + b2_ref[...]).astype(o_ref.dtype)


def feed_forward(x, w1, b1, w2, b2, *, tm=256, th=512,
                 compute_dtype=jnp.bfloat16):
    """x: (B, T, D).  w1: (D, H), b1: (H,), w2: (H, D), b2: (D,)  (H = 4*D)."""
    B, T, D = x.shape
    H = w1.shape[1]
    M = B * T

    # Lane-dense padding of feature dims; pad M to a multiple of the row tile.
    Dp = _round_up(D, 128)
    Hp = _round_up(H, 128)
    th = min(th, Hp)
    Hp = _round_up(Hp, th)
    tm = min(tm, _round_up(M, 128))   # don't over-inflate the tile for tiny M
    Mp = _round_up(M, tm)

    x_p = _pad2(x.reshape(M, D), Mp, Dp).astype(compute_dtype)
    w1_p = _pad2(w1, Dp, Hp).astype(compute_dtype)
    w2_p = _pad2(w2, Hp, Dp).astype(compute_dtype)
    b1_p = jnp.pad(b1.astype(jnp.float32), (0, Hp - H)).reshape(1, Hp)
    b2_p = jnp.pad(b2.astype(jnp.float32), (0, Dp - D)).reshape(1, Dp)

    bytes_accessed = (
        x_p.size * x_p.dtype.itemsize
        + w1_p.size * w1_p.dtype.itemsize
        + w2_p.size * w2_p.dtype.itemsize
        + b1_p.size * 4 + b2_p.size * 4
        + Mp * Dp * x.dtype.itemsize
    )

    out = pl.pallas_call(
        ffn_kernel,
        out_shape=jax.ShapeDtypeStruct((Mp, Dp), x.dtype),
        grid_spec=pltpu.PrefetchScalarGridSpec(
            num_scalar_prefetch=0,
            grid=(Mp // tm, Hp // th),
            in_specs=[
                pl.BlockSpec((tm, Dp), lambda i, h: (i, 0)),   # x tile (resident over h)
                pl.BlockSpec((Dp, th), lambda i, h: (0, h)),   # W1 hidden block
                pl.BlockSpec((1, th), lambda i, h: (0, h)),    # b1 hidden block
                pl.BlockSpec((th, Dp), lambda i, h: (h, 0)),   # W2 hidden block
                pl.BlockSpec((1, Dp), lambda i, h: (0, 0)),    # b2
            ],
            out_specs=pl.BlockSpec((tm, Dp), lambda i, h: (i, 0)),
            scratch_shapes=[pltpu.VMEM((tm, Dp), jnp.float32)],
        ),
        compiler_params=pltpu.CompilerParams(
            dimension_semantics=("parallel", "arbitrary"),
            vmem_limit_bytes=48 * 1024 * 1024,
        ),
        cost_estimate=pl.CostEstimate(
            flops=4 * Mp * Dp * Hp,
            transcendentals=0,
            bytes_accessed=bytes_accessed,
        ),
    )(x_p, w1_p, b1_p, w2_p, b2_p)

    return out[:M, :D].reshape(B, T, D)


def feed_forward_ref(x, w1, b1, w2, b2):
    h = jnp.maximum(jnp.einsum("btd,dh->bth", x, w1) + b1, 0.0)
    return jnp.einsum("bth,hd->btd", h, w2) + b2


if __name__ == "__main__":
    # Small shapes consistent with the module: n_embed=32, hidden=4*32=128.
    B, T, D = 2, 8, 32
    H = 4 * D

    key = jax.random.PRNGKey(0)
    kx, k1, k2, k3, k4, kx2 = jax.random.split(key, 6)

    x = jax.random.normal(kx, (B, T, D), dtype=jnp.float32)

    # PyTorch Linear default init: uniform(-1/sqrt(fan_in), 1/sqrt(fan_in)).
    lim1 = 1.0 / jnp.sqrt(jnp.float32(D))
    lim2 = 1.0 / jnp.sqrt(jnp.float32(H))
    w1 = jax.random.uniform(k1, (D, H), jnp.float32, -lim1, lim1)   # Linear1.weight.T
    b1 = jax.random.uniform(k2, (H,), jnp.float32, -lim1, lim1)
    w2 = jax.random.uniform(k3, (H, D), jnp.float32, -lim2, lim2)   # Linear2.weight.T
    b2 = jax.random.uniform(k4, (D,), jnp.float32, -lim2, lim2)

    y_ref = feed_forward_ref(x, w1, b1, w2, b2)

    # f32 compute path: tight-tolerance check.
    y_f32 = feed_forward(x, w1, b1, w2, b2, compute_dtype=jnp.float32)
    y_f32 = jax.block_until_ready(y_f32)
    assert y_f32.shape == (B, T, D)
    assert jnp.allclose(y_f32, y_ref, atol=1e-5, rtol=1e-5)

    # bf16 MXU path (default): loose tolerance appropriate for bf16 operands.
    y_bf16 = feed_forward(x, w1, b1, w2, b2)
    y_bf16 = jax.block_until_ready(y_bf16)
    assert jnp.allclose(y_bf16, y_ref, atol=5e-2, rtol=5e-2)

    # Exercise a multi-tile M axis (M = 256 rows, two 128-row tiles) and a
    # multi-block hidden axis (th=64->128 padded is one block; use th=128).
    x_big = jax.random.normal(kx2, (4, 64, D), dtype=jnp.float32)
    y_big = feed_forward(x_big, w1, b1, w2, b2, tm=128, th=128)
    y_big = jax.block_until_ready(y_big)
    assert jnp.allclose(y_big, feed_forward_ref(x_big, w1, b1, w2, b2),
                        atol=5e-2, rtol=5e-2)

    print("KERNEL_OK")
</pallas_src>

<mosaic_0001>
module attributes {stable_mosaic.version = 11 : i64} {
  func.func @ffn_kernel(%arg0: i32, %arg1: i32, %arg2: memref<128x128xf32, #tpu.memory_space<vmem>>, %arg3: memref<128x128xf32, #tpu.memory_space<vmem>>, %arg4: memref<1x128xf32, #tpu.memory_space<vmem>>, %arg5: memref<128x128xf32, #tpu.memory_space<vmem>>, %arg6: memref<1x128xf32, #tpu.memory_space<vmem>>, %arg7: memref<128x128xf32, #tpu.memory_space<vmem>>, %arg8: memref<128x128xf32, #tpu.memory_space<vmem>>) attributes {dimension_semantics = [#tpu.dimension_semantics<parallel>, #tpu.dimension_semantics<arbitrary>], iteration_bounds = array<i64: 1, 1>, scalar_prefetch = 0 : i64, scratch_operands = 1 : i64, tpu.core_type = #tpu.core_type<tc>, window_params = [{transform_indices = @transform_0, window_bounds = array<i64: 128, 128>}, {transform_indices = @transform_1, window_bounds = array<i64: 128, 128>}, {transform_indices = @transform_2, window_bounds = array<i64: 1, 128>}, {transform_indices = @transform_3, window_bounds = array<i64: 128, 128>}, {pipeline_mode = #tpu.pipeline_mode<synchronous>, transform_indices = @transform_4, window_bounds = array<i64: 1, 128>}, {transform_indices = @transform_5, window_bounds = array<i64: 128, 128>}]} {
    %c0_i32 = arith.constant 0 : i32
    %0 = arith.cmpi eq, %arg1, %c0_i32 : i32
    %1 = arith.extui %0 : i1 to i32
    %c0_i32_0 = arith.constant 0 : i32
    %2 = arith.cmpi ne, %1, %c0_i32_0 : i32
    scf.if %2 {
      %cst_16 = arith.constant 0.000000e+00 : f32
      %19 = vector.broadcast %cst_16 : f32 to vector<128x128xf32>
      %c0_17 = arith.constant 0 : index
      %c0_18 = arith.constant 0 : index
      %20 = vector.load %arg8[%c0_17, %c0_18] : memref<128x128xf32, #tpu.memory_space<vmem>>, vector<128x128xf32>
      tpu.vector_store %arg8[%c0_17, %c0_18], %19 {strides = array<i32>} : memref<128x128xf32, #tpu.memory_space<vmem>>, vector<128x128xf32>,
    } else {
    }
    %c0 = arith.constant 0 : index
    %c0_1 = arith.constant 0 : index
    %3 = vector.load %arg2[%c0, %c0_1] : memref<128x128xf32, #tpu.memory_space<vmem>>, vector<128x128xf32>
    %c0_2 = arith.constant 0 : index
    %c0_3 = arith.constant 0 : index
    %4 = vector.load %arg3[%c0_2, %c0_3] : memref<128x128xf32, #tpu.memory_space<vmem>>, vector<128x128xf32>
    %cst = arith.constant dense<0.000000e+00> : vector<128x128xf32>
    %5 = tpu.matmul %3, %4, %cst {dimension_numbers = #tpu.dot_dimension_numbers<[1], [0], [0], [1], [0, 0, 1, 1], [], []>} : vector<128x128xf32>, vector<128x128xf32>, vector<128x128xf32> -> vector<128x128xf32>
    %c0_4 = arith.constant 0 : index
    %c0_5 = arith.constant 0 : index
    %6 = vector.load %arg4[%c0_4, %c0_5] : memref<1x128xf32, #tpu.memory_space<vmem>>, vector<1x128xf32>
    %7 = vector.broadcast %6 : vector<1x128xf32> to vector<128x128xf32>
    %8 = arith.addf %5, %7 : vector<128x128xf32>
    %cst_6 = arith.constant 0.000000e+00 : f32
    %9 = vector.broadcast %cst_6 : f32 to vector<128x128xf32>
    %10 = arith.maximumf %8, %9 : vector<128x128xf32>
    %c0_7 = arith.constant 0 : index
    %c0_8 = arith.constant 0 : index
    %11 = vector.load %arg8[%c0_7, %c0_8] : memref<128x128xf32, #tpu.memory_space<vmem>>, vector<128x128xf32>
    %c0_9 = arith.constant 0 : index
    %c0_10 = arith.constant 0 : index
    %12 = vector.load %arg5[%c0_9, %c0_10] : memref<128x128xf32, #tpu.memory_space<vmem>>, vector<128x128xf32>
    %cst_11 = arith.constant dense<0.000000e+00> : vector<128x128xf32>
    %13 = tpu.matmul %10, %12, %cst_11 {dimension_numbers = #tpu.dot_dimension_numbers<[1], [0], [0], [1], [0, 0, 1, 1], [], []>} : vector<128x128xf32>, vector<128x128xf32>, vector<128x128xf32> -> vector<128x128xf32>
    %14 = arith.addf %11, %13 : vector<128x128xf32>
    %c0_12 = arith.constant 0 : index
    %c0_13 = arith.constant 0 : index
    %15 = vector.load %arg8[%c0_12, %c0_13] : memref<128x128xf32, #tpu.memory_space<vmem>>, vector<128x128xf32>
    tpu.vector_store %arg8[%c0_12, %c0_13], %14 {strides = array<i32>} : memref<128x128xf32, #tpu.memory_space<vmem>>, vector<128x128xf32>,
    %c0_i32_14 = arith.constant 0 : i32
    %16 = arith.cmpi eq, %arg1, %c0_i32_14 : i32
    %17 = arith.extui %16 : i1 to i32
    %c0_i32_15 = arith.constant 0 : i32
    %18 = arith.cmpi ne, %17, %c0_i32_15 : i32
    scf.if %18 {
      %c0_16 = arith.constant 0 : index
      %c0_17 = arith.constant 0 : index
      %19 = vector.load %arg8[%c0_16, %c0_17] : memref<128x128xf32, #tpu.memory_space<vmem>>, vector<128x128xf32>
      %c0_18 = arith.constant 0 : index
      %c0_19 = arith.constant 0 : index
      %20 = vector.load %arg6[%c0_18, %c0_19] : memref<1x128xf32, #tpu.memory_space<vmem>>, vector<1x128xf32>
      %21 = vector.broadcast %20 : vector<1x128xf32> to vector<128x128xf32>
      %22 = arith.addf %19, %21 : vector<128x128xf32>
      %c0_20 = arith.constant 0 : index
      %c0_21 = arith.constant 0 : index
      %23 = vector.load %arg7[%c0_20, %c0_21] : memref<128x128xf32, #tpu.memory_space<vmem>>, vector<128x128xf32>
      tpu.vector_store %arg7[%c0_20, %c0_21], %22 {strides = array<i32>} : memref<128x128xf32, #tpu.memory_space<vmem>>, vector<128x128xf32>,
    } else {
    }
    return
  }
  func.func @transform_0(%arg0: i32, %arg1: i32) -> (i32, i32) {
    %c0_i32 = arith.constant 0 : i32
    %c0_i32_0 = arith.constant 0 : i32
    return %arg0, %c0_i32 : i32, i32
  }
  func.func @transform_1(%arg0: i32, %arg1: i32) -> (i32, i32) {
    %c0_i32 = arith.constant 0 : i32
    %c0_i32_0 = arith.constant 0 : i32
    return %c0_i32, %arg1 : i32, i32
  }
  func.func @transform_2(%arg0: i32, %arg1: i32) -> (i32, i32) {
    %c0_i32 = arith.constant 0 : i32
    %c0_i32_0 = arith.constant 0 : i32
    return %c0_i32, %arg1 : i32, i32
  }
  func.func @transform_3(%arg0: i32, %arg1: i32) -> (i32, i32) {
    %c0_i32 = arith.constant 0 : i32
    %c0_i32_0 = arith.constant 0 : i32
    return %arg1, %c0_i32 : i32, i32
  }
  func.func @transform_4(%arg0: i32, %arg1: i32) -> (i32, i32) {
    %c0_i32 = arith.constant 0 : i32
    %c0_i32_0 = arith.constant 0 : i32
    %c0_i32_1 = arith.constant 0 : i32
    return %c0_i32, %c0_i32_0 : i32, i32
  }
  func.func @transform_5(%arg0: i32, %arg1: i32) -> (i32, i32) {
    %c0_i32 = arith.constant 0 : i32
    %c0_i32_0 = arith.constant 0 : i32
    return %arg0, %c0_i32 : i32, i32
  }
}

</mosaic_0001>

<llo_original>
// kernel: tpu_custom_call.1
$region0: #{tpu_custom_call.1}
  #allocation0 [shape = 'u32[]', space=smem, size = 0x4, offset = 0x4, fixed_abs, tag = 'smem constant byte address 0x4 - core index']
  #allocation1 [shape = 'u32[144,128]{1,0:T(1,128)}', space=vmem, size = 0x12000, scoped, tag = 'internal scratch']
  #allocation2 [shape = 'f32[128,128]{1,0:T(8,128)}', space=vmem, size = 0x10000, scoped, tag = 'scratch operand']
  %s0 = inlined_call_operand.hbm [shape: f32[128,128], index: 0, kind: input, shape index: {}]
  %s1 = inlined_call_operand.hbm [shape: f32[128,128], index: 1, kind: input, shape index: {}]
  %s2 = inlined_call_operand.vmem [shape: f32[1,128], index: 2, kind: input, shape index: {}]
  %s3 = inlined_call_operand.hbm [shape: f32[128,128], index: 3, kind: input, shape index: {}]
  %s4 = inlined_call_operand.vmem [shape: f32[1,128], index: 4, kind: input, shape index: {}]
  %s5 = inlined_call_operand.hbm [shape: f32[128,128], index: 5, kind: output, shape index: {}]
  %s6 = sld [smem:[#allocation0]]
  $region50: #{tpu_custom_call.1} parent=0
    _
  %s8 = ssub.s32 1, %s6
  %s9 = scalar_select 0, %s8, %s6
  $region1: #{tpu_custom_call.1} parent=0
    #allocation3 [shape = 'u8[65536]{0}', space=vmem, size = 0x10000, scoped, tag = 'input window, operand 0, single buffered']
    #allocation4 [shape = 's32[1]{0}', space=sflag, size = 0x4, scoped, tag = 'scoped memory for tpu_custom_call.1']
    #allocation5 [shape = 's32[1]{0}', space=sflag, size = 0x4, scoped, tag = 'scoped memory for tpu_custom_call.1']
    #allocation6 [shape = 'u8[65536]{0}', space=vmem, size = 0x10000, scoped, tag = 'input window, operand 1, single buffered']
    #allocation7 [shape = 's32[1]{0}', space=sflag, size = 0x4, scoped, tag = 'scoped memory for tpu_custom_call.1']
    #allocation8 [shape = 'u8[65536]{0}', space=vmem, size = 0x10000, scoped, tag = 'input window, operand 3, single buffered']
    #allocation9 [shape = 'u8[65536]{0}', space=vmem, size = 0x10000, scoped, tag = 'output window, operand 0, single buffered']
    %10 = vsyncpa [#allocation4], 0
    %11 = vsyncpa [#allocation7], 0
    %12 = vsyncpa [#allocation5], 0
    // Predicated region
    $region2: #{tpu_custom_call.1} parent=1 // pred_check
      _
    $region3: #{tpu_custom_call.1} parent=1 // pred_check_branch
      %14 = sbr.rel (0) target = $region5
    $region4: #{tpu_custom_call.1} parent=1 // pred_region
      %s16 = ssub.s32 2048, 2048
      %17 = vsyncadd [#allocation4], %s16
      %s18 = sshll.u32 [#allocation3], 4
      %s19 = int_to_ptr.vmem [resolvable:$true] %s18
      %24 = dma.hbm_to_vmem [thread:$0]  %s0, 2048, %s19, [#allocation4], 128, 128, 8
    $region5: #{tpu_custom_call.1} parent=1 // pred_fallthru
      _
    // Predicated region
    $region6: #{tpu_custom_call.1} parent=1 // pred_check
      _
    $region7: #{tpu_custom_call.1} parent=1 // pred_check_branch
      %26 = sbr.rel (0) target = $region9
    $region8: #{tpu_custom_call.1} parent=1 // pred_region
      %s28 = ssub.s32 2048, 2048
      %29 = vsyncadd [#allocation7], %s28
      %s30 = sshll.u32 [#allocation6], 4
      %s31 = int_to_ptr.vmem [resolvable:$true] %s30
      %36 = dma.hbm_to_vmem [thread:$0]  %s1, 2048, %s31, [#allocation7], 128, 128, 8
    $region9: #{tpu_custom_call.1} parent=1 // pred_fallthru
      _
    // Predicated region
    $region10: #{tpu_custom_call.1} parent=1 // pred_check
      _
    $region11: #{tpu_custom_call.1} parent=1 // pred_check_branch
      %38 = sbr.rel (0) target = $region13
    $region12: #{tpu_custom_call.1} parent=1 // pred_region
      _
    $region13: #{tpu_custom_call.1} parent=1 // pred_fallthru
      _
    // Predicated region
    $region14: #{tpu_custom_call.1} parent=1 // pred_check
      _
    $region15: #{tpu_custom_call.1} parent=1 // pred_check_branch
      %40 = sbr.rel (0) target = $region17
    $region16: #{tpu_custom_call.1} parent=1 // pred_region
      %s42 = ssub.s32 2048, 2048
      %43 = vsyncadd [#allocation7], %s42
      %s44 = sshll.u32 [#allocation8], 4
      %s45 = int_to_ptr.vmem [resolvable:$true] %s44
      %50 = dma.hbm_to_vmem [thread:$0]  %s3, 2048, %s45, [#allocation7], 128, 128, 8
    $region17: #{tpu_custom_call.1} parent=1 // pred_fallthru
      _
    // Predicated region
    $region18: #{tpu_custom_call.1} parent=1 // pred_check
      _
    $region19: #{tpu_custom_call.1} parent=1 // pred_check_branch
      %52 = sbr.rel (0) target = $region21
    $region20: #{tpu_custom_call.1} parent=1 // pred_region
      _
    $region21: #{tpu_custom_call.1} parent=1 // pred_fallthru
      _
    // Predicated region
    $region22: #{tpu_custom_call.1} parent=1 // pred_check
      _
    $region23: #{tpu_custom_call.1} parent=1 // pred_check_branch
      %54 = sbr.rel (0) target = $region25
    $region24: #{tpu_custom_call.1} parent=1 // pred_region
      %55 = dma.done [#allocation4], 2048
    $region25: #{tpu_custom_call.1} parent=1 // pred_fallthru
      _
    // Predicated region
    $region26: #{tpu_custom_call.1} parent=1 // pred_check
      _
    $region27: #{tpu_custom_call.1} parent=1 // pred_check_branch
      %57 = sbr.rel (0) target = $region29
    $region28: #{tpu_custom_call.1} parent=1 // pred_region
      %58 = dma.done [#allocation7], 2048
    $region29: #{tpu_custom_call.1} parent=1 // pred_fallthru
      _
    // Predicated region
    $region30: #{tpu_custom_call.1} parent=1 // pred_check
      _
    $region31: #{tpu_custom_call.1} parent=1 // pred_check_branch
      %60 = sbr.rel (0) target = $region33
    $region32: #{tpu_custom_call.1} parent=1 // pred_region
      %61 = dma.done [#allocation7], 2048
    $region33: #{tpu_custom_call.1} parent=1 // pred_fallthru
      _
    %p62 = scmp.eq.s32.totalorder 0, 0
    // Predicated region
    $region34: #{tpu_custom_call.1} parent=1 // pred_check
      %p63 = pneg %p62
    $region35: #{tpu_custom_call.1} parent=1 // pred_check_branch
      %65 = sbr.rel (%p63) target = $region37
    $region36: #{tpu_custom_call.1} parent=1 // pred_region
      %66 = vst [vmem:[#allocation2] sm:$0xff] 0.0
      %67 = vst [vmem:[#allocation2 + $0x8] sm:$0xff] 0.0
      %68 = vst [vmem:[#allocation2 + $0x10] sm:$0xff] 0.0
      %69 = vst [vmem:[#allocation2 + $0x18] sm:$0xff] 0.0
      %70 = vst [vmem:[#allocation2 + $0x20] sm:$0xff] 0.0
      %71 = vst [vmem:[#allocation2 + $0x28] sm:$0xff] 0.0
      %72 = vst [vmem:[#allocation2 + $0x30] sm:$0xff] 0.0
      %73 = vst [vmem:[#allocation2 + $0x38] sm:$0xff] 0.0
      %74 = vst [vmem:[#allocation2 + $0x40] sm:$0xff] 0.0
      %75 = vst [vmem:[#allocation2 + $0x48] sm:$0xff] 0.0
      %76 = vst [vmem:[#allocation2 + $0x50] sm:$0xff] 0.0
      %77 = vst [vmem:[#allocation2 + $0x58] sm:$0xff] 0.0
      %78 = vst [vmem:[#allocation2 + $0x60] sm:$0xff] 0.0
      %79 = vst [vmem:[#allocation2 + $0x68] sm:$0xff] 0.0
      %80 = vst [vmem:[#allocation2 + $0x70] sm:$0xff] 0.0
      %81 = vst [vmem:[#allocation2 + $0x78] sm:$0xff] 0.0
    $region37: #{tpu_custom_call.1} parent=1 // pred_fallthru
      _
    %v82 = vld [vmem:[#allocation3] sm:$0xff]
    %v83 = vld [vmem:[#allocation3 + $0x8] sm:$0xff]
    %v84 = vld [vmem:[#allocation3 + $0x10] sm:$0xff]
    %v85 = vld [vmem:[#allocation3 + $0x18] sm:$0xff]
    %v86 = vld [vmem:[#allocation3 + $0x20] sm:$0xff]
    %v87 = vld [vmem:[#allocation3 + $0x28] sm:$0xff]
    %v88 = vld [vmem:[#allocation3 + $0x30] sm:$0xff]
    %v89 = vld [vmem:[#allocation3 + $0x38] sm:$0xff]
    %v90 = vld [vmem:[#allocation3 + $0x40] sm:$0xff]
    %v91 = vld [vmem:[#allocation3 + $0x48] sm:$0xff]
    %v92 = vld [vmem:[#allocation3 + $0x50] sm:$0xff]
    %v93 = vld [vmem:[#allocation3 + $0x58] sm:$0xff]
    %v94 = vld [vmem:[#allocation3 + $0x60] sm:$0xff]
    %v95 = vld [vmem:[#allocation3 + $0x68] sm:$0xff]
    %v96 = vld [vmem:[#allocation3 + $0x70] sm:$0xff]
    %v97 = vld [vmem:[#allocation3 + $0x78] sm:$0xff]
    %v98 = vld [vmem:[#allocation6] sm:$0xff]
    %v99 = vld [vmem:[#allocation6 + $0x8] sm:$0xff]
    %v100 = vld [vmem:[#allocation6 + $0x10] sm:$0xff]
    %v101 = vld [vmem:[#allocation6 + $0x18] sm:$0xff]
    %v102 = vld [vmem:[#allocation6 + $0x20] sm:$0xff]
    %v103 = vld [vmem:[#allocation6 + $0x28] sm:$0xff]
    %v104 = vld [vmem:[#allocation6 + $0x30] sm:$0xff]
    %v105 = vld [vmem:[#allocation6 + $0x38] sm:$0xff]
    %v106 = vld [vmem:[#allocation6 + $0x40] sm:$0xff]
    %v107 = vld [vmem:[#allocation6 + $0x48] sm:$0xff]
    %v108 = vld [vmem:[#allocation6 + $0x50] sm:$0xff]
    %v109 = vld [vmem:[#allocation6 + $0x58] sm:$0xff]
    %v110 = vld [vmem:[#allocation6 + $0x60] sm:$0xff]
    %v111 = vld [vmem:[#allocation6 + $0x68] sm:$0xff]
    %v112 = vld [vmem:[#allocation6 + $0x70] sm:$0xff]
    %v113 = vld [vmem:[#allocation6 + $0x78] sm:$0xff]
    %v114 = vld [vmem:[%s2] sm:$0x1]
    %v116 = vlaneseq
    %v117 = vshrl.u32 %v116, 7
    %v118 = vsub.s32 0, %v117
    %v119 = vrot.slane %v114, %v118
    %121 = vmatprep.subr.mxu0 0.0
    %122 = vmatpush1.msra.mxu0 %v98
    %123 = vmatprep.subr.mxu0 0.0
    %124 = vmatpush1.msra.mxu0 %v99
    %125 = vmatprep.subr.mxu0 0.0
    %126 = vmatpush1.msra.mxu0 %v100
    %127 = vmatprep.subr.mxu0 0.0
    %128 = vmatpush1.msra.mxu0 %v101
    %129 = vmatprep.subr.mxu0 0.0
    %130 = vmatpush1.msra.mxu0 %v102
    %131 = vmatprep.subr.mxu0 0.0
    %132 = vmatpush1.msra.mxu0 %v103
    %133 = vmatprep.subr.mxu0 0.0
    %134 = vmatpush1.msra.mxu0 %v104
    %135 = vmatprep.subr.mxu0 0.0
    %136 = vmatpush1.msra.mxu0 %v105
    %137 = vmatprep.subr.mxu0 0.0
    %138 = vmatpush1.msra.mxu0 %v106
    %139 = vmatprep.subr.mxu0 0.0
    %140 = vmatpush1.msra.mxu0 %v107
    %141 = vmatprep.subr.mxu0 0.0
    %142 = vmatpush1.msra.mxu0 %v108
    %143 = vmatprep.subr.mxu0 0.0
    %144 = vmatpush1.msra.mxu0 %v109
    %145 = vmatprep.subr.mxu0 0.0
    %146 = vmatpush1.msra.mxu0 %v110
    %147 = vmatprep.subr.mxu0 0.0
    %148 = vmatpush1.msra.mxu0 %v111
    %149 = vmatprep.subr.mxu0 0.0
    %150 = vmatpush1.msra.mxu0 %v112
    %151 = vmatprep.subr.mxu0 0.0
    %152 = vmatpush1.msra.mxu0 %v113
    %153 = vmatprep.subr.mxu0 0.0
    %154 = vmatpush1.msra.mxu0 0.0
    %155 = vmatprep.subr.mxu0 0.0
    %156 = vmatpush1.msra.mxu0 0.0
    %157 = vmatprep.subr.mxu0 0.0
    %158 = vmatpush1.msra.mxu0 0.0
    %159 = vmatprep.subr.mxu0 0.0
    %160 = vmatpush1.msra.mxu0 0.0
    %161 = vmatprep.subr.mxu0 0.0
    %162 = vmatpush1.msra.mxu0 0.0
    %163 = vmatprep.subr.mxu0 0.0
    %164 = vmatpush1.msra.mxu0 0.0
    %165 = vmatprep.subr.mxu0 0.0
    %166 = vmatpush1.msra.mxu0 0.0
    %167 = vmatprep.subr.mxu0 0.0
    %168 = vmatpush1.msra.mxu0 0.0
    %169 = vmatprep.subr.mxu0 0.0
    %170 = vmatpush1.msra.mxu0 0.0
    %171 = vmatprep.subr.mxu0 0.0
    %172 = vmatpush1.msra.mxu0 0.0
    %173 = vmatprep.subr.mxu0 0.0
    %174 = vmatpush1.msra.mxu0 0.0
    %175 = vmatprep.subr.mxu0 0.0
    %176 = vmatpush1.msra.mxu0 0.0
    %177 = vmatprep.subr.mxu0 0.0
    %178 = vmatpush1.msra.mxu0 0.0
    %179 = vmatprep.subr.mxu0 0.0
    %180 = vmatpush1.msra.mxu0 0.0
    %181 = vmatprep.subr.mxu0 0.0
    %182 = vmatpush1.msra.mxu0 0.0
    %183 = vmatprep.subr.mxu0 0.0
    %184 = vmatpush1.msra.mxu0 0.0
    %185 = vmatprep.mubr.f32.mxu0 0.0
    %186 = vmatmul.mubr.f32.gmra.mrb[0].mxu0 %v82
    %v187 = vpop.f32.mrb[0].mxu0
    %v188 = vadd.f32 %v119, %v187
    %v189 = vpop.f32.mrb[0].mxu0
    %190 = vmatprep.mubr.f32.mxu0 0.0
    %191 = vmatmul.mubr.f32.gmra.mrb[0].mxu0 %v83
    %v192 = vpop.f32.mrb[0].mxu0
    %v193 = vadd.f32 %v119, %v192
    %v194 = vpop.f32.mrb[0].mxu0
    %195 = vmatprep.mubr.f32.mxu0 0.0
    %196 = vmatmul.mubr.f32.gmra.mrb[0].mxu0 %v84
    %v197 = vpop.f32.mrb[0].mxu0
    %v198 = vadd.f32 %v119, %v197
    %v199 = vpop.f32.mrb[0].mxu0
    %200 = vmatprep.mubr.f32.mxu0 0.0
    %201 = vmatmul.mubr.f32.gmra.mrb[0].mxu0 %v85
    %v202 = vpop.f32.mrb[0].mxu0
    %v203 = vadd.f32 %v119, %v202
    %v204 = vpop.f32.mrb[0].mxu0
    %205 = vmatprep.mubr.f32.mxu0 0.0
    %206 = vmatmul.mubr.f32.gmra.mrb[0].mxu0 %v86
    %v207 = vpop.f32.mrb[0].mxu0
    %v208 = vadd.f32 %v119, %v207
    %v209 = vpop.f32.mrb[0].mxu0
    %210 = vmatprep.mubr.f32.mxu0 0.0
    %211 = vmatmul.mubr.f32.gmra.mrb[0].mxu0 %v87
    %v212 = vpop.f32.mrb[0].mxu0
    %v213 = vadd.f32 %v119, %v212
    %v214 = vpop.f32.mrb[0].mxu0
    %215 = vmatprep.mubr.f32.mxu0 0.0
    %216 = vmatmul.mubr.f32.gmra.mrb[0].mxu0 %v88
    %v217 = vpop.f32.mrb[0].mxu0
    %v218 = vadd.f32 %v119, %v217
    %v219 = vpop.f32.mrb[0].mxu0
    %220 = vmatprep.mubr.f32.mxu0 0.0
    %221 = vmatmul.mubr.f32.gmra.mrb[0].mxu0 %v89
    %v222 = vpop.f32.mrb[0].mxu0
    %v223 = vadd.f32 %v119, %v222
    %v224 = vpop.f32.mrb[0].mxu0
    %225 = vmatprep.mubr.f32.mxu0 0.0
    %226 = vmatmul.mubr.f32.gmra.mrb[0].mxu0 %v90
    %v227 = vpop.f32.mrb[0].mxu0
    %v228 = vadd.f32 %v119, %v227
    %v229 = vpop.f32.mrb[0].mxu0
    %230 = vmatprep.mubr.f32.mxu0 0.0
    %231 = vmatmul.mubr.f32.gmra.mrb[0].mxu0 %v91
    %v232 = vpop.f32.mrb[0].mxu0
    %v233 = vadd.f32 %v119, %v232
    %v234 = vpop.f32.mrb[0].mxu0
    %235 = vmatprep.mubr.f32.mxu0 0.0
    %236 = vmatmul.mubr.f32.gmra.mrb[0].mxu0 %v92
    %v237 = vpop.f32.mrb[0].mxu0
    %v238 = vadd.f32 %v119, %v237
    %v239 = vpop.f32.mrb[0].mxu0
    %240 = vmatprep.mubr.f32.mxu0 0.0
    %241 = vmatmul.mubr.f32.gmra.mrb[0].mxu0 %v93
    %v242 = vpop.f32.mrb[0].mxu0
    %v243 = vadd.f32 %v119, %v242
    %v244 = vpop.f32.mrb[0].mxu0
    %245 = vmatprep.mubr.f32.mxu0 0.0
    %246 = vmatmul.mubr.f32.gmra.mrb[0].mxu0 %v94
    %v247 = vpop.f32.mrb[0].mxu0
    %v248 = vadd.f32 %v119, %v247
    %v249 = vpop.f32.mrb[0].mxu0
    %250 = vmatprep.mubr.f32.mxu0 0.0
    %251 = vmatmul.mubr.f32.gmra.mrb[0].mxu0 %v95
    %v252 = vpop.f32.mrb[0].mxu0
    %v253 = vadd.f32 %v119, %v252
    %v254 = vpop.f32.mrb[0].mxu0
    %255 = vmatprep.mubr.f32.mxu0 0.0
    %256 = vmatmul.mubr.f32.gmra.mrb[0].mxu0 %v96
    %v257 = vpop.f32.mrb[0].mxu0
    %v258 = vadd.f32 %v119, %v257
    %v259 = vpop.f32.mrb[0].mxu0
    %260 = vmatprep.mubr.f32.mxu0 0.0
    %261 = vmatmul.mubr.f32.gmra.mrb[0].mxu0 %v97
    %v262 = vpop.f32.mrb[0].mxu0
    %v263 = vadd.f32 %v119, %v262
    %v264 = vpop.f32.mrb[0].mxu0
    %265 = vdwg.mxu0
    %v266 = vmax.f32 %v188, 0.0
    %v267 = vmax.f32 %v193, 0.0
    %v268 = vmax.f32 %v198, 0.0
    %v269 = vmax.f32 %v203, 0.0
    %v270 = vmax.f32 %v208, 0.0
    %v271 = vmax.f32 %v213, 0.0
    %v272 = vmax.f32 %v218, 0.0
    %v273 = vmax.f32 %v223, 0.0
    %v274 = vmax.f32 %v228, 0.0
    %v275 = vmax.f32 %v233, 0.0
    %v276 = vmax.f32 %v238, 0.0
    %v277 = vmax.f32 %v243, 0.0
    %v278 = vmax.f32 %v248, 0.0
    %v279 = vmax.f32 %v253, 0.0
    %v280 = vmax.f32 %v258, 0.0
    %v281 = vmax.f32 %v263, 0.0
    %v282 = vld [vmem:[#allocation2] sm:$0xff]
    %v283 = vld [vmem:[#allocation2 + $0x8] sm:$0xff]
    %v284 = vld [vmem:[#allocation2 + $0x10] sm:$0xff]
    %v285 = vld [vmem:[#allocation2 + $0x18] sm:$0xff]
    %v286 = vld [vmem:[#allocation2 + $0x20] sm:$0xff]
    %v287 = vld [vmem:[#allocation2 + $0x28] sm:$0xff]
    %v288 = vld [vmem:[#allocation2 + $0x30] sm:$0xff]
    %v289 = vld [vmem:[#allocation2 + $0x38] sm:$0xff]
    %v290 = vld [vmem:[#allocation2 + $0x40] sm:$0xff]
    %v291 = vld [vmem:[#allocation2 + $0x48] sm:$0xff]
    %v292 = vld [vmem:[#allocation2 + $0x50] sm:$0xff]
    %v293 = vld [vmem:[#allocation2 + $0x58] sm:$0xff]
    %v294 = vld [vmem:[#allocation2 + $0x60] sm:$0xff]
    %v295 = vld [vmem:[#allocation2 + $0x68] sm:$0xff]
    %v296 = vld [vmem:[#allocation2 + $0x70] sm:$0xff]
    %v297 = vld [vmem:[#allocation2 + $0x78] sm:$0xff]
    %v298 = vld [vmem:[#allocation8] sm:$0xff]
    %v299 = vld [vmem:[#allocation8 + $0x8] sm:$0xff]
    %v300 = vld [vmem:[#allocation8 + $0x10] sm:$0xff]
    %v301 = vld [vmem:[#allocation8 + $0x18] sm:$0xff]
    %v302 = vld [vmem:[#allocation8 + $0x20] sm:$0xff]
    %v303 = vld [vmem:[#allocation8 + $0x28] sm:$0xff]
    %v304 = vld [vmem:[#allocation8 + $0x30] sm:$0xff]
    %v305 = vld [vmem:[#allocation8 + $0x38] sm:$0xff]
    %v306 = vld [vmem:[#allocation8 + $0x40] sm:$0xff]
    %v307 = vld [vmem:[#allocation8 + $0x48] sm:$0xff]
    %v308 = vld [vmem:[#allocation8 + $0x50] sm:$0xff]
    %v309 = vld [vmem:[#allocation8 + $0x58] sm:$0xff]
    %v310 = vld [vmem:[#allocation8 + $0x60] sm:$0xff]
    %v311 = vld [vmem:[#allocation8 + $0x68] sm:$0xff]
    %v312 = vld [vmem:[#allocation8 + $0x70] sm:$0xff]
    %v313 = vld [vmem:[#allocation8 + $0x78] sm:$0xff]
    %314 = vmatprep.subr.mxu0 0.0
    %315 = vmatpush1.msra.mxu0 %v298
    %316 = vmatprep.subr.mxu0 0.0
    %317 = vmatpush1.msra.mxu0 %v299
    %318 = vmatprep.subr.mxu0 0.0
    %319 = vmatpush1.msra.mxu0 %v300
    %320 = vmatprep.subr.mxu0 0.0
    %321 = vmatpush1.msra.mxu0 %v301
    %322 = vmatprep.subr.mxu0 0.0
    %323 = vmatpush1.msra.mxu0 %v302
    %324 = vmatprep.subr.mxu0 0.0
    %325 = vmatpush1.msra.mxu0 %v303
    %326 = vmatprep.subr.mxu0 0.0
    %327 = vmatpush1.msra.mxu0 %v304
    %328 = vmatprep.subr.mxu0 0.0
    %329 = vmatpush1.msra.mxu0 %v305
    %330 = vmatprep.subr.mxu0 0.0
    %331 = vmatpush1.msra.mxu0 %v306
    %332 = vmatprep.subr.mxu0 0.0
    %333 = vmatpush1.msra.mxu0 %v307
    %334 = vmatprep.subr.mxu0 0.0
    %335 = vmatpush1.msra.mxu0 %v308
    %336 = vmatprep.subr.mxu0 0.0
    %337 = vmatpush1.msra.mxu0 %v309
    %338 = vmatprep.subr.mxu0 0.0
    %339 = vmatpush1.msra.mxu0 %v310
    %340 = vmatprep.subr.mxu0 0.0
    %341 = vmatpush1.msra.mxu0 %v311
    %342 = vmatprep.subr.mxu0 0.0
    %343 = vmatpush1.msra.mxu0 %v312
    %344 = vmatprep.subr.mxu0 0.0
    %345 = vmatpush1.msra.mxu0 %v313
    %346 = vmatprep.subr.mxu0 0.0
    %347 = vmatpush1.msra.mxu0 0.0
    %348 = vmatprep.subr.mxu0 0.0
    %349 = vmatpush1.msra.mxu0 0.0
    %350 = vmatprep.subr.mxu0 0.0
    %351 = vmatpush1.msra.mxu0 0.0
    %352 = vmatprep.subr.mxu0 0.0
    %353 = vmatpush1.msra.mxu0 0.0
    %354 = vmatprep.subr.mxu0 0.0
    %355 = vmatpush1.msra.mxu0 0.0
    %356 = vmatprep.subr.mxu0 0.0
    %357 = vmatpush1.msra.mxu0 0.0
    %358 = vmatprep.subr.mxu0 0.0
    %359 = vmatpush1.msra.mxu0 0.0
    %360 = vmatprep.subr.mxu0 0.0
    %361 = vmatpush1.msra.mxu0 0.0
    %362 = vmatprep.subr.mxu0 0.0
    %363 = vmatpush1.msra.mxu0 0.0
    %364 = vmatprep.subr.mxu0 0.0
    %365 = vmatpush1.msra.mxu0 0.0
    %366 = vmatprep.subr.mxu0 0.0
    %367 = vmatpush1.msra.mxu0 0.0
    %368 = vmatprep.subr.mxu0 0.0
    %369 = vmatpush1.msra.mxu0 0.0
    %370 = vmatprep.subr.mxu0 0.0
    %371 = vmatpush1.msra.mxu0 0.0
    %372 = vmatprep.subr.mxu0 0.0
    %373 = vmatpush1.msra.mxu0 0.0
    %374 = vmatprep.subr.mxu0 0.0
    %375 = vmatpush1.msra.mxu0 0.0
    %376 = vmatprep.subr.mxu0 0.0
    %377 = vmatpush1.msra.mxu0 0.0
    %378 = vmatprep.mubr.f32.mxu0 0.0
    %379 = vmatmul.mubr.f32.gmra.mrb[0].mxu0 %v266
    %v380 = vpop.f32.mrb[0].mxu0
    %v381 = vadd.f32 0.0, %v380
    %v382 = vpop.f32.mrb[0].mxu0
    %383 = vmatprep.mubr.f32.mxu0 0.0
    %384 = vmatmul.mubr.f32.gmra.mrb[0].mxu0 %v267
    %v385 = vpop.f32.mrb[0].mxu0
    %v386 = vadd.f32 0.0, %v385
    %v387 = vpop.f32.mrb[0].mxu0
    %388 = vmatprep.mubr.f32.mxu0 0.0
    %389 = vmatmul.mubr.f32.gmra.mrb[0].mxu0 %v268
    %v390 = vpop.f32.mrb[0].mxu0
    %v391 = vadd.f32 0.0, %v390
    %v392 = vpop.f32.mrb[0].mxu0
    %393 = vmatprep.mubr.f32.mxu0 0.0
    %394 = vmatmul.mubr.f32.gmra.mrb[0].mxu0 %v269
    %v395 = vpop.f32.mrb[0].mxu0
    %v396 = vadd.f32 0.0, %v395
    %v397 = vpop.f32.mrb[0].mxu0
    %398 = vmatprep.mubr.f32.mxu0 0.0
    %399 = vmatmul.mubr.f32.gmra.mrb[0].mxu0 %v270
    %v400 = vpop.f32.mrb[0].mxu0
    %v401 = vadd.f32 0.0, %v400
    %v402 = vpop.f32.mrb[0].mxu0
    %403 = vmatprep.mubr.f32.mxu0 0.0
    %404 = vmatmul.mubr.f32.gmra.mrb[0].mxu0 %v271
    %v405 = vpop.f32.mrb[0].mxu0
    %v406 = vadd.f32 0.0, %v405
    %v407 = vpop.f32.mrb[0].mxu0
    %408 = vmatprep.mubr.f32.mxu0 0.0
    %409 = vmatmul.mubr.f32.gmra.mrb[0].mxu0 %v272
    %v410 = vpop.f32.mrb[0].mxu0
    %v411 = vadd.f32 0.0, %v410
    %v412 = vpop.f32.mrb[0].mxu0
    %413 = vmatprep.mubr.f32.mxu0 0.0
    %414 = vmatmul.mubr.f32.gmra.mrb[0].mxu0 %v273
    %v415 = vpop.f32.mrb[0].mxu0
    %v416 = vadd.f32 0.0, %v415
    %v417 = vpop.f32.mrb[0].mxu0
    %418 = vmatprep.mubr.f32.mxu0 0.0
    %419 = vmatmul.mubr.f32.gmra.mrb[0].mxu0 %v274
    %v420 = vpop.f32.mrb[0].mxu0
    %v421 = vadd.f32 0.0, %v420
    %v422 = vpop.f32.mrb[0].mxu0
    %423 = vmatprep.mubr.f32.mxu0 0.0
    %424 = vmatmul.mubr.f32.gmra.mrb[0].mxu0 %v275
    %v425 = vpop.f32.mrb[0].mxu0
    %v426 = vadd.f32 0.0, %v425
    %v427 = vpop.f32.mrb[0].mxu0
    %428 = vmatprep.mubr.f32.mxu0 0.0
    %429 = vmatmul.mubr.f32.gmra.mrb[0].mxu0 %v276
    %v430 = vpop.f32.mrb[0].mxu0
    %v431 = vadd.f32 0.0, %v430
    %v432 = vpop.f32.mrb[0].mxu0
    %433 = vmatprep.mubr.f32.mxu0 0.0
    %434 = vmatmul.mubr.f32.gmra.mrb[0].mxu0 %v277
    %v435 = vpop.f32.mrb[0].mxu0
    %v436 = vadd.f32 0.0, %v435
    %v437 = vpop.f32.mrb[0].mxu0
    %438 = vmatprep.mubr.f32.mxu0 0.0
    %439 = vmatmul.mubr.f32.gmra.mrb[0].mxu0 %v278
    %v440 = vpop.f32.mrb[0].mxu0
    %v441 = vadd.f32 0.0, %v440
    %v442 = vpop.f32.mrb[0].mxu0
    %443 = vmatprep.mubr.f32.mxu0 0.0
    %444 = vmatmul.mubr.f32.gmra.mrb[0].mxu0 %v279
    %v445 = vpop.f32.mrb[0].mxu0
    %v446 = vadd.f32 0.0, %v445
    %v447 = vpop.f32.mrb[0].mxu0
    %448 = vmatprep.mubr.f32.mxu0 0.0
    %449 = vmatmul.mubr.f32.gmra.mrb[0].mxu0 %v280
    %v450 = vpop.f32.mrb[0].mxu0
    %v451 = vadd.f32 0.0, %v450
    %v452 = vpop.f32.mrb[0].mxu0
    %453 = vmatprep.mubr.f32.mxu0 0.0
    %454 = vmatmul.mubr.f32.gmra.mrb[0].mxu0 %v281
    %v455 = vpop.f32.mrb[0].mxu0
    %v456 = vadd.f32 0.0, %v455
    %v457 = vpop.f32.mrb[0].mxu0
    %458 = vdwg.mxu0
    %v459 = vadd.f32 %v282, %v381
    %v460 = vadd.f32 %v283, %v386
    %v461 = vadd.f32 %v284, %v391
    %v462 = vadd.f32 %v285, %v396
    %v463 = vadd.f32 %v286, %v401
    %v464 = vadd.f32 %v287, %v406
    %v465 = vadd.f32 %v288, %v411
    %v466 = vadd.f32 %v289, %v416
    %v467 = vadd.f32 %v290, %v421
    %v468 = vadd.f32 %v291, %v426
    %v469 = vadd.f32 %v292, %v431
    %v470 = vadd.f32 %v293, %v436
    %v471 = vadd.f32 %v294, %v441
    %v472 = vadd.f32 %v295, %v446
    %v473 = vadd.f32 %v296, %v451
    %v474 = vadd.f32 %v297, %v456
    %475 = vst [vmem:[#allocation2] sm:$0xff] %v459
    %476 = vst [vmem:[#allocation2 + $0x8] sm:$0xff] %v460
    %477 = vst [vmem:[#allocation2 + $0x10] sm:$0xff] %v461
    %478 = vst [vmem:[#allocation2 + $0x18] sm:$0xff] %v462
    %479 = vst [vmem:[#allocation2 + $0x20] sm:$0xff] %v463
    %480 = vst [vmem:[#allocation2 + $0x28] sm:$0xff] %v464
    %481 = vst [vmem:[#allocation2 + $0x30] sm:$0xff] %v465
    %482 = vst [vmem:[#allocation2 + $0x38] sm:$0xff] %v466
    %483 = vst [vmem:[#allocation2 + $0x40] sm:$0xff] %v467
    %484 = vst [vmem:[#allocation2 + $0x48] sm:$0xff] %v468
    %485 = vst [vmem:[#allocation2 + $0x50] sm:$0xff] %v469
    %486 = vst [vmem:[#allocation2 + $0x58] sm:$0xff] %v470
    %487 = vst [vmem:[#allocation2 + $0x60] sm:$0xff] %v471
    %488 = vst [vmem:[#allocation2 + $0x68] sm:$0xff] %v472
    %489 = vst [vmem:[#allocation2 + $0x70] sm:$0xff] %v473
    %490 = vst [vmem:[#allocation2 + $0x78] sm:$0xff] %v474
    // Predicated region
    $region38: #{tpu_custom_call.1} parent=1 // pred_check
      %p491 = pneg %p62
    $region39: #{tpu_custom_call.1} parent=1 // pred_check_branch
      %493 = sbr.rel (%p491) target = $region41
    $region40: #{tpu_custom_call.1} parent=1 // pred_region
      %v494 = vld [vmem:[#allocation2] sm:$0xff]
      %v495 = vld [vmem:[#allocation2 + $0x8] sm:$0xff]
      %v496 = vld [vmem:[#allocation2 + $0x10] sm:$0xff]
      %v497 = vld [vmem:[#allocation2 + $0x18] sm:$0xff]
      %v498 = vld [vmem:[#allocation2 + $0x20] sm:$0xff]
      %v499 = vld [vmem:[#allocation2 + $0x28] sm:$0xff]
      %v500 = vld [vmem:[#allocation2 + $0x30] sm:$0xff]
      %v501 = vld [vmem:[#allocation2 + $0x38] sm:$0xff]
      %v502 = vld [vmem:[#allocation2 + $0x40] sm:$0xff]
      %v503 = vld [vmem:[#allocation2 + $0x48] sm:$0xff]
      %v504 = vld [vmem:[#allocation2 + $0x50] sm:$0xff]
      %v505 = vld [vmem:[#allocation2 + $0x58] sm:$0xff]
      %v506 = vld [vmem:[#allocation2 + $0x60] sm:$0xff]
      %v507 = vld [vmem:[#allocation2 + $0x68] sm:$0xff]
      %v508 = vld [vmem:[#allocation2 + $0x70] sm:$0xff]
      %v509 = vld [vmem:[#allocation2 + $0x78] sm:$0xff]
      %v510 = vld [vmem:[%s4] sm:$0x1]
      %v512 = vlaneseq
      %v513 = vshrl.u32 %v512, 7
      %v514 = vsub.s32 0, %v513
      %v515 = vrot.slane %v510, %v514
      %v517 = vadd.f32 %v494, %v515
      %v518 = vadd.f32 %v495, %v515
      %v519 = vadd.f32 %v496, %v515
      %v520 = vadd.f32 %v497, %v515
      %v521 = vadd.f32 %v498, %v515
      %v522 = vadd.f32 %v499, %v515
      %v523 = vadd.f32 %v500, %v515
      %v524 = vadd.f32 %v501, %v515
      %v525 = vadd.f32 %v502, %v515
      %v526 = vadd.f32 %v503, %v515
      %v527 = vadd.f32 %v504, %v515
      %v528 = vadd.f32 %v505, %v515
      %v529 = vadd.f32 %v506, %v515
      %v530 = vadd.f32 %v507, %v515
      %v531 = vadd.f32 %v508, %v515
      %v532 = vadd.f32 %v509, %v515
      %533 = vst [vmem:[#allocation9] sm:$0xff] %v517
      %534 = vst [vmem:[#allocation9 + $0x8] sm:$0xff] %v518
      %535 = vst [vmem:[#allocation9 + $0x10] sm:$0xff] %v519
      %536 = vst [vmem:[#allocation9 + $0x18] sm:$0xff] %v520
      %537 = vst [vmem:[#allocation9 + $0x20] sm:$0xff] %v521
      %538 = vst [vmem:[#allocation9 + $0x28] sm:$0xff] %v522
      %539 = vst [vmem:[#allocation9 + $0x30] sm:$0xff] %v523
      %540 = vst [vmem:[#allocation9 + $0x38] sm:$0xff] %v524
      %541 = vst [vmem:[#allocation9 + $0x40] sm:$0xff] %v525
      %542 = vst [vmem:[#allocation9 + $0x48] sm:$0xff] %v526
      %543 = vst [vmem:[#allocation9 + $0x50] sm:$0xff] %v527
      %544 = vst [vmem:[#allocation9 + $0x58] sm:$0xff] %v528
      %545 = vst [vmem:[#allocation9 + $0x60] sm:$0xff] %v529
      %546 = vst [vmem:[#allocation9 + $0x68] sm:$0xff] %v530
      %547 = vst [vmem:[#allocation9 + $0x70] sm:$0xff] %v531
      %548 = vst [vmem:[#allocation9 + $0x78] sm:$0xff] %v532
    $region41: #{tpu_custom_call.1} parent=1 // pred_fallthru
      _
    // Predicated region
    $region42: #{tpu_custom_call.1} parent=1 // pred_check
      _
    $region43: #{tpu_custom_call.1} parent=1 // pred_check_branch
      %550 = sbr.rel (0) target = $region45
    $region44: #{tpu_custom_call.1} parent=1 // pred_region
      %s552 = ssub.s32 2048, 2048
      %553 = vsyncadd [#allocation5], %s552
      %s554 = sshll.u32 [#allocation9], 4
      %s555 = int_to_ptr.vmem [resolvable:$true] %s554
      %560 = dma.vmem_to_hbm [thread:$0]  %s555, 2048, %s5, [#allocation5], 128, 128, 8
    $region45: #{tpu_custom_call.1} parent=1 // pred_fallthru
      _
    // Predicated region
    $region46: #{tpu_custom_call.1} parent=1 // pred_check
      _
    $region47: #{tpu_custom_call.1} parent=1 // pred_check_branch
      %562 = sbr.rel (0) target = $region49
    $region48: #{tpu_custom_call.1} parent=1 // pred_region
      %563 = dma.done [#allocation5], 2048
    $region49: #{tpu_custom_call.1} parent=1 // pred_fallthru
      _
    %564 = vsyncpa [#allocation4], 1
    %565 = vsyncpa [#allocation7], 1
    %566 = vsyncpa [#allocation5], 1

</llo_original>
